<compile_context>
chip_gen: v7x
topology: tpu7x:2x2x1
jax: 0.10.0
libtpu: 0.0.40
codegen_flags: <defaults>
</compile_context>

<pallas_src>
import math
import functools

import jax
import jax.numpy as jnp
from jax.experimental import pallas as pl
from jax.experimental.pallas import tpu as pltpu


def _random_layer_kernel(*refs, num_inputs):
    """One output tile: acc = prod_i (x_i_tile @ R_i_tile), f32 accumulation."""
    x_refs = refs[:num_inputs]
    r_refs = refs[num_inputs:2 * num_inputs]
    o_ref = refs[2 * num_inputs]
    acc = jnp.dot(x_refs[0][...], r_refs[0][...],
                  preferred_element_type=jnp.float32)
    for i in range(1, num_inputs):
        acc = acc * jnp.dot(x_refs[i][...], r_refs[i][...],
                            preferred_element_type=jnp.float32)
    o_ref[...] = acc.astype(o_ref.dtype)


def prepare_random_layer_params(random_matrices, output_dim, *,
                                weights_dtype=jnp.bfloat16):
    """Init-time parameter prep (analogue of the torch __init__).

    * Folds the fixed 1/output_dim**(1/n) scale into R_0 (a parameter).
    * Casts weights to bf16 by default (halves weight HBM traffic; MXU-native).
    * Bakes NO layout/tiling decision in: column/row tiling is chosen at call
      time, so the same params run with per-generation optimal tiling.
    """
    num = len(random_matrices)
    scale = 1.0 / math.pow(float(output_dim), 1.0 / num)
    mats = []
    for i, r in enumerate(random_matrices):
        r_i = jnp.asarray(r, jnp.float32)
        if i == 0:
            r_i = r_i * scale  # fold the fixed output-dim scale into R_0
        mats.append(r_i.astype(weights_dtype))
    return dict(random_matrix=tuple(mats),
                dims=tuple(int(r.shape[0]) for r in random_matrices),
                output_dim=int(output_dim),
                num_inputs=num,
                dtype=jnp.dtype(weights_dtype))


def _choose_tn(output_dim):
    """Lane-dense column tile: 512 (or a 128-multiple divisor) for large dims."""
    if output_dim % 128 != 0 or output_dim <= 512:
        # TODO(synk): masked tail column block for very large non-128-aligned
        # output_dim instead of one full-width block.
        return output_dim
    for cand in (512, 256, 128):
        if output_dim % cand == 0:
            return cand
    return output_dim


def _choose_tm(n_rows):
    """Bounded row tile; single full-batch block only when the batch is small."""
    return n_rows if n_rows <= 256 else 256


def _vmem_capacity_bytes():
    try:
        return int(pltpu.get_tpu_info().vmem_capacity_bytes)
    except Exception:
        return 64 << 20  # conservative (v7x per-TC VMEM)


def random_layer_apply(input_list, params):
    """JAX/Pallas equivalent of RandomLayer.forward."""
    num = params["num_inputs"]
    dims = params["dims"]
    output_dim = params["output_dim"]
    mats = params["random_matrix"]
    w_dtype = params["dtype"]
    N = int(input_list[0].shape[0])
    for i, x in enumerate(input_list):
        assert x.shape == (N, dims[i]), "input shape mismatch vs params"

    tn = _choose_tn(output_dim)
    tm = _choose_tm(N)
    # Column axis outer -> each R column tile stays resident across the inner
    # row steps; both axes are independent ("parallel").
    grid = (pl.cdiv(output_dim, tn), pl.cdiv(N, tm))

    xs = [jnp.asarray(x, w_dtype) for x in input_list]

    # VMEM budget: double-buffered pipeline tiles + in-kernel f32 intermediates
    # (running acc + current dot result) + slack, capped at 85% of the real
    # device VMEM (v7x has 64 MiB per TC, not 128).
    w_isz = jnp.dtype(w_dtype).itemsize
    d_sum = sum(dims)
    vmem_bytes = (2 * tm * d_sum * w_isz        # x_i row tiles (double-buffered)
                  + 2 * d_sum * tn * w_isz      # R_i column tiles
                  + 2 * tm * tn * 4             # output tile
                  + 2 * tm * tn * 4             # acc + current dot (f32)
                  + (2 << 20))                  # slack / MXU result staging
    vmem_limit = int(min(max(vmem_bytes, 4 << 20),
                         int(0.85 * _vmem_capacity_bytes())))

    in_specs = (
        [pl.BlockSpec((tm, dims[i]), lambda jc, ir: (ir, 0))   # x_i: full K, row-tiled
         for i in range(num)]
        + [pl.BlockSpec((dims[i], tn), lambda jc, ir: (0, jc))  # R_i: column-tiled
           for i in range(num)]
    )
    out_spec = pl.BlockSpec((tm, tn), lambda jc, ir: (ir, jc))

    kernel = functools.partial(_random_layer_kernel, num_inputs=num)

    return pl.pallas_call(
        kernel,
        out_shape=jax.ShapeDtypeStruct((N, output_dim), jnp.float32),
        grid_spec=pltpu.PrefetchScalarGridSpec(
            num_scalar_prefetch=0,
            grid=grid,
            in_specs=in_specs,
            out_specs=out_spec,
        ),
        compiler_params=pltpu.CompilerParams(
            dimension_semantics=("parallel", "parallel"),
            vmem_limit_bytes=vmem_limit),
    )(*xs, *mats)


if __name__ == "__main__":
    # Shapes consistent with RandomLayer's typical CDAN usage:
    # two inputs (features + class probs), batch N = 8, output_dim = 1024.
    key = jax.random.PRNGKey(0)
    N = 8
    input_dim_list = [32, 8]
    output_dim = 1024
    n = len(input_dim_list)

    keys = jax.random.split(key, 2 * n)
    # Deterministic "random_matrix" parameters (torch.randn equivalent).
    random_matrices = [
        jax.random.normal(keys[i], (input_dim_list[i], output_dim), jnp.float32)
        for i in range(n)
    ]
    input_list = [
        jax.random.normal(keys[n + i], (N, input_dim_list[i]), jnp.float32)
        for i in range(n)
    ]

    params = prepare_random_layer_params(random_matrices, output_dim)

    out = jax.block_until_ready(random_layer_apply(input_list, params))
    assert out.shape == (N, output_dim)
    assert out.dtype == jnp.float32

    # Same-precision reference (bf16 operands, f32 accumulation) -- tight check
    # of the kernel logic itself.
    xs_c = [x.astype(params["dtype"]) for x in input_list]
    ref_same = jnp.dot(xs_c[0], params["random_matrix"][0],
                       preferred_element_type=jnp.float32)
    for i in range(1, n):
        ref_same = ref_same * jnp.dot(xs_c[i], params["random_matrix"][i],
                                      preferred_element_type=jnp.float32)
    assert jnp.allclose(out, ref_same, rtol=1e-2, atol=1e-2), \
        "mismatch vs same-precision reference"

    # Full-f32 reference (mirrors the PyTorch forward exactly) -- bf16 weights
    # introduce small rounding, so check relative Frobenius error.
    ys = [input_list[i] @ random_matrices[i] for i in range(n)]
    ref = ys[0] / math.pow(float(output_dim), 1.0 / n)
    for y in ys[1:]:
        ref = ref * y
    rel_err = jnp.linalg.norm(out - ref) / jnp.linalg.norm(ref)
    assert float(rel_err) < 2e-2, f"relative error too large: {rel_err}"

    print("KERNEL_OK")
</pallas_src>

<mosaic_0001>
module attributes {stable_mosaic.version = 11 : i64} {
  func.func @_random_layer_kernel(%arg0: i32, %arg1: i32, %arg2: memref<8x32xbf16, #tpu.memory_space<vmem>>, %arg3: memref<8x8xbf16, #tpu.memory_space<vmem>>, %arg4: memref<32x512xbf16, #tpu.memory_space<vmem>>, %arg5: memref<8x512xbf16, #tpu.memory_space<vmem>>, %arg6: memref<8x512xf32, #tpu.memory_space<vmem>>) attributes {dimension_semantics = [#tpu.dimension_semantics<parallel>, #tpu.dimension_semantics<parallel>], iteration_bounds = array<i64: 2, 1>, scalar_prefetch = 0 : i64, scratch_operands = 0 : i64, tpu.core_type = #tpu.core_type<tc>, window_params = [{transform_indices = @transform_0, window_bounds = array<i64: 8, 32>}, {transform_indices = @transform_1, window_bounds = array<i64: 8, 8>}, {transform_indices = @transform_2, window_bounds = array<i64: 32, 512>}, {transform_indices = @transform_3, window_bounds = array<i64: 8, 512>}, {transform_indices = @transform_4, window_bounds = array<i64: 8, 512>}]} {
    %c0 = arith.constant 0 : index
    %c0_0 = arith.constant 0 : index
    %0 = vector.load %arg2[%c0, %c0_0] : memref<8x32xbf16, #tpu.memory_space<vmem>>, vector<8x32xbf16>
    %c0_1 = arith.constant 0 : index
    %c0_2 = arith.constant 0 : index
    %1 = vector.load %arg4[%c0_1, %c0_2] : memref<32x512xbf16, #tpu.memory_space<vmem>>, vector<32x512xbf16>
    %cst = arith.constant dense<0.000000e+00> : vector<8x512xf32>
    %2 = tpu.matmul %0, %1, %cst {dimension_numbers = #tpu.dot_dimension_numbers<[1], [0], [0], [1], [0, 0, 1, 1], [], []>} : vector<8x32xbf16>, vector<32x512xbf16>, vector<8x512xf32> -> vector<8x512xf32>
    %c0_3 = arith.constant 0 : index
    %c0_4 = arith.constant 0 : index
    %3 = vector.load %arg3[%c0_3, %c0_4] : memref<8x8xbf16, #tpu.memory_space<vmem>>, vector<8x8xbf16>
    %c0_5 = arith.constant 0 : index
    %c0_6 = arith.constant 0 : index
    %4 = vector.load %arg5[%c0_5, %c0_6] : memref<8x512xbf16, #tpu.memory_space<vmem>>, vector<8x512xbf16>
    %cst_7 = arith.constant dense<0.000000e+00> : vector<8x512xf32>
    %5 = tpu.matmul %3, %4, %cst_7 {dimension_numbers = #tpu.dot_dimension_numbers<[1], [0], [0], [1], [0, 0, 1, 1], [], []>} : vector<8x8xbf16>, vector<8x512xbf16>, vector<8x512xf32> -> vector<8x512xf32>
    %6 = arith.mulf %2, %5 : vector<8x512xf32>
    %c0_8 = arith.constant 0 : index
    %c0_9 = arith.constant 0 : index
    %7 = vector.load %arg6[%c0_8, %c0_9] : memref<8x512xf32, #tpu.memory_space<vmem>>, vector<8x512xf32>
    tpu.vector_store %arg6[%c0_8, %c0_9], %6 {strides = array<i32>} : memref<8x512xf32, #tpu.memory_space<vmem>>, vector<8x512xf32>,
    return
  }
  func.func @transform_0(%arg0: i32, %arg1: i32) -> (i32, i32) {
    %c0_i32 = arith.constant 0 : i32
    %c0_i32_0 = arith.constant 0 : i32
    return %arg1, %c0_i32 : i32, i32
  }
  func.func @transform_1(%arg0: i32, %arg1: i32) -> (i32, i32) {
    %c0_i32 = arith.constant 0 : i32
    %c0_i32_0 = arith.constant 0 : i32
    return %arg1, %c0_i32 : i32, i32
  }
  func.func @transform_2(%arg0: i32, %arg1: i32) -> (i32, i32) {
    %c0_i32 = arith.constant 0 : i32
    %c0_i32_0 = arith.constant 0 : i32
    return %c0_i32, %arg0 : i32, i32
  }
  func.func @transform_3(%arg0: i32, %arg1: i32) -> (i32, i32) {
    %c0_i32 = arith.constant 0 : i32
    %c0_i32_0 = arith.constant 0 : i32
    return %c0_i32, %arg0 : i32, i32
  }
  func.func @transform_4(%arg0: i32, %arg1: i32) -> (i32, i32) {
    %c0_i32 = arith.constant 0 : i32
    return %arg1, %arg0 : i32, i32
  }
}

</mosaic_0001>

<llo_original>
// kernel: tpu_custom_call.1
$region0: #{tpu_custom_call.1}
  #allocation0 [shape = 'u32[]', space=smem, size = 0x4, offset = 0x4, fixed_abs, tag = 'smem constant byte address 0x4 - core index']
  #allocation1 [shape = 'u32[144,128]{1,0:T(1,128)}', space=vmem, size = 0x12000, scoped, tag = 'internal scratch']
  %s0 = inlined_call_operand.hbm [shape: bf16[8,32], index: 0, kind: input, shape index: {}]
  %s1 = inlined_call_operand.hbm [shape: bf16[8,8], index: 1, kind: input, shape index: {}]
  %s2 = inlined_call_operand.hbm [shape: bf16[32,1024], index: 2, kind: input, shape index: {}]
  %s3 = inlined_call_operand.hbm [shape: bf16[8,1024], index: 3, kind: input, shape index: {}]
  %s4 = inlined_call_operand.hbm [shape: f32[8,1024], index: 4, kind: output, shape index: {}]
  %s5 = sld [smem:[#allocation0]]
  $region65: #{tpu_custom_call.1} parent=0
    _
  %s7 = ssub.s32 1, %s5
  %s8 = scalar_select 0, %s7, %s5
  $region1: #{tpu_custom_call.1} parent=0
    #allocation2 [shape = 'u8[2048]{0}', space=vmem, size = 0x800, scoped, tag = 'input window, operand 0, single buffered']
    #allocation3 [shape = 's32[2]{0}', space=sflag, size = 0x8, scoped, tag = 'scoped memory for tpu_custom_call.1']
    #allocation4 [shape = 's32[2]{0}', space=sflag, size = 0x8, scoped, tag = 'scoped memory for tpu_custom_call.1']
    #allocation5 [shape = 'u8[2048]{0}', space=vmem, size = 0x800, scoped, tag = 'input window, operand 1, single buffered']
    #allocation6 [shape = 's32[1]{0}', space=sflag, size = 0x4, scoped, tag = 'scoped memory for tpu_custom_call.1']
    #allocation7 [shape = 'u8[65536]{0}', space=vmem, size = 0x10000, scoped, tag = 'input window, operand 2']
    #allocation8 [shape = 'u8[16384]{0}', space=vmem, size = 0x4000, scoped, tag = 'input window, operand 3']
    #allocation9 [shape = 'u8[32768]{0}', space=vmem, size = 0x8000, scoped, tag = 'output window, operand 0']
    %9 = vsyncpa [#allocation3], 0
    %10 = vsyncpa [#allocation6], 0
    %11 = vsyncpa [#allocation4], 0
    %s12 = scalar_lea.sflag [#allocation4], 1
    %13 = vsyncpa %s12, 0
    loop: start=0, step=1, limit=4
    $region2: #{tpu_custom_call.1} parent=1 // loop_pre_header
      _
    $region3: #{tpu_custom_call.1} parent=1 // loop_header
      %s15 = sphi 0, %s19
      %p16 = scmp.ge.s32.totalorder %s15, 4
      %s22 = sphi 0, %s34
      %s23 = sphi 0, %s30
      %s24 = sphi 0, %s22
      %s25 = sphi 0, %s23
      %s26 = sphi 0, %s24
      %s27 = sphi 0, %s25
      %s37 = sphi 0, %s39
      %s40 = sphi 0, %s37
      %s41 = sphi 0, %s40
      %s57 = sphi 0, %s41
      %s63 = sphi 0, %s65
      %s66 = sphi 0, %s63
      %s67 = sphi 0, %s66
      %s83 = sphi 0, %s67
      %s89 = sphi 0, %s91
      %s92 = sphi 0, %s89
      %s93 = sphi 0, %s92
      %s109 = sphi 0, %s93
      %s115 = sphi 0, %s117
      %s118 = sphi 0, %s115
      %s119 = sphi 0, %s118
      %s135 = sphi 0, %s119
      %s143 = sphi 0, %s145
      %s146 = sphi 0, %s143
      %s147 = sphi 0, %s146
      %s163 = sphi 0, %s147
    $region4: #{tpu_custom_call.1} parent=1 // loop_header_branch
      %18 = sbr.rel (%p16) target = $region8
    $region5: #{tpu_custom_call.1} parent=1 // loop_body
      %s20 = ssub.s32 %s15, 1
      %s21 = ssub.s32 %s15, 2
      %s28 = sadd.s32 1, %s23
      %p29 = scmp.ge.s32.totalorder %s28, 1
      %s30 = scalar_select %p29, 0, %s28
      %s31 = sadd.s32 1, %s22
      %s32 = scalar_select %p29, %s31, %s22
      %p33 = scmp.ge.s32.totalorder %s32, 2
      %s34 = scalar_select %p33, 0, %s32
      %s35 = ssub.s32 %s23, %s30
      %p36 = scmp.eq.s32.totalorder %s35, 0
      %s38 = sadd.s32 %s37, 1
      %s39 = scalar_select %p36, %s37, %s38
      %p42 = pneg %p36
      %p43 = scmp.eq.s32.totalorder %s15, 1
      %p44 = por %p42, %p43
      %p45 = scmp.ne.s32.totalorder %s37, %s40
      %p46 = scmp.eq.s32.totalorder %s15, 0
      %p47 = por %p45, %p46
      %p48 = scmp.ne.s32.totalorder %s37, %s40
      %p49 = scmp.eq.s32.totalorder %s20, 1
      %p50 = por %p48, %p49
      %p51 = scmp.ne.s32.totalorder %s40, %s41
      %p52 = scmp.eq.s32.totalorder %s20, 0
      %p53 = por %p51, %p52
      %p54 = scmp.ne.s32.totalorder %s40, %s41
      %p55 = scmp.eq.s32.totalorder %s21, 1
      %p56 = por %p54, %p55
      %p58 = scmp.ne.s32.totalorder %s41, %s57
      %p59 = scmp.eq.s32.totalorder %s21, 0
      %p60 = por %p58, %p59
      %s61 = ssub.s32 %s23, %s30
      %p62 = scmp.eq.s32.totalorder %s61, 0
      %s64 = sadd.s32 %s63, 1
      %s65 = scalar_select %p62, %s63, %s64
      %p68 = pneg %p62
      %p69 = scmp.eq.s32.totalorder %s15, 1
      %p70 = por %p68, %p69
      %p71 = scmp.ne.s32.totalorder %s63, %s66
      %p72 = scmp.eq.s32.totalorder %s15, 0
      %p73 = por %p71, %p72
      %p74 = scmp.ne.s32.totalorder %s63, %s66
      %p75 = scmp.eq.s32.totalorder %s20, 1
      %p76 = por %p74, %p75
      %p77 = scmp.ne.s32.totalorder %s66, %s67
      %p78 = scmp.eq.s32.totalorder %s20, 0
      %p79 = por %p77, %p78
      %p80 = scmp.ne.s32.totalorder %s66, %s67
      %p81 = scmp.eq.s32.totalorder %s21, 1
      %p82 = por %p80, %p81
      %p84 = scmp.ne.s32.totalorder %s67, %s83
      %p85 = scmp.eq.s32.totalorder %s21, 0
      %p86 = por %p84, %p85
      %s87 = ssub.s32 %s22, %s34
      %p88 = scmp.eq.s32.totalorder %s87, 0
      %s90 = sadd.s32 %s89, 1
      %s91 = scalar_select %p88, %s89, %s90
      %p94 = pneg %p88
      %p95 = scmp.eq.s32.totalorder %s15, 1
      %p96 = por %p94, %p95
      %p97 = scmp.ne.s32.totalorder %s89, %s92
      %p98 = scmp.eq.s32.totalorder %s15, 0
      %p99 = por %p97, %p98
      %p100 = scmp.ne.s32.totalorder %s89, %s92
      %p101 = scmp.eq.s32.totalorder %s20, 1
      %p102 = por %p100, %p101
      %p103 = scmp.ne.s32.totalorder %s92, %s93
      %p104 = scmp.eq.s32.totalorder %s20, 0
      %p105 = por %p103, %p104
      %p106 = scmp.ne.s32.totalorder %s92, %s93
      %p107 = scmp.eq.s32.totalorder %s21, 1
      %p108 = por %p106, %p107
      %p110 = scmp.ne.s32.totalorder %s93, %s109
      %p111 = scmp.eq.s32.totalorder %s21, 0
      %p112 = por %p110, %p111
      %s113 = ssub.s32 %s22, %s34
      %p114 = scmp.eq.s32.totalorder %s113, 0
      %s116 = sadd.s32 %s115, 1
      %s117 = scalar_select %p114, %s115, %s116
      %p120 = pneg %p114
      %p121 = scmp.eq.s32.totalorder %s15, 1
      %p122 = por %p120, %p121
      %p123 = scmp.ne.s32.totalorder %s115, %s118
      %p124 = scmp.eq.s32.totalorder %s15, 0
      %p125 = por %p123, %p124
      %p126 = scmp.ne.s32.totalorder %s115, %s118
      %p127 = scmp.eq.s32.totalorder %s20, 1
      %p128 = por %p126, %p127
      %p129 = scmp.ne.s32.totalorder %s118, %s119
      %p130 = scmp.eq.s32.totalorder %s20, 0
      %p131 = por %p129, %p130
      %p132 = scmp.ne.s32.totalorder %s118, %s119
      %p133 = scmp.eq.s32.totalorder %s21, 1
      %p134 = por %p132, %p133
      %p136 = scmp.ne.s32.totalorder %s119, %s135
      %p137 = scmp.eq.s32.totalorder %s21, 0
      %p138 = por %p136, %p137
      %s139 = ssub.s32 %s23, %s30
      %s140 = ssub.s32 %s22, %s34
      %s141 = sor.u32 %s139, %s140
      %p142 = scmp.eq.s32.totalorder %s141, 0
      %s144 = sadd.s32 %s143, 1
      %s145 = scalar_select %p142, %s143, %s144
      %p148 = pneg %p142
      %p149 = scmp.eq.s32.totalorder %s15, 1
      %p150 = por %p148, %p149
      %p151 = scmp.ne.s32.totalorder %s143, %s146
      %p152 = scmp.eq.s32.totalorder %s15, 0
      %p153 = por %p151, %p152
      %p154 = scmp.ne.s32.totalorder %s143, %s146
      %p155 = scmp.eq.s32.totalorder %s20, 1
      %p156 = por %p154, %p155
      %p157 = scmp.ne.s32.totalorder %s146, %s147
      %p158 = scmp.eq.s32.totalorder %s20, 0
      %p159 = por %p157, %p158
      %p160 = scmp.ne.s32.totalorder %s146, %s147
      %p161 = scmp.eq.s32.totalorder %s21, 1
      %p162 = por %p160, %p161
      %p164 = scmp.ne.s32.totalorder %s147, %s163
      %p165 = scmp.eq.s32.totalorder %s21, 0
      %p166 = por %p164, %p165
      %p167 = scmp.le.s32.totalorder 1, %s15
      %p168 = scmp.lt.s32.totalorder %s15, 3
      %p169 = pnand %p167, %p168
      %p170 = pneg %p169
      // Predicated region
      $region9: #{tpu_custom_call.1} parent=5 // pred_check
        _
      $region10: #{tpu_custom_call.1} parent=5 // pred_check_branch
        %172 = sbr.rel (%p169) target = $region12
      $region11: #{tpu_custom_call.1} parent=5 // pred_region
        %s173 = ssub.s32 %s15, 1
        // Predicated region
        $region13: #{tpu_custom_call.1} parent=11 // pred_check
          %p174 = pneg %p53
        $region14: #{tpu_custom_call.1} parent=11 // pred_check_branch
          %176 = sbr.rel (%p174) target = $region16
        $region15: #{tpu_custom_call.1} parent=11 // pred_region
          %s178 = ssub.s32 64, 64
          %179 = vsyncadd [#allocation3], %s178
          %s180 = smul.addr %s25, 64
          %s181 = scalar_lea.hbm %s0, %s180
          %s183 = sshll.u32 [#allocation2], 4
          %s184 = int_to_ptr.vmem [resolvable:$true] %s183
          %186 = dma.hbm_to_vmem [thread:$0]  %s181, 64, %s184, [#allocation3]
        $region16: #{tpu_custom_call.1} parent=11 // pred_fallthru
          _
        // Predicated region
        $region17: #{tpu_custom_call.1} parent=11 // pred_check
          %p187 = pneg %p79
        $region18: #{tpu_custom_call.1} parent=11 // pred_check_branch
          %189 = sbr.rel (%p187) target = $region20
        $region19: #{tpu_custom_call.1} parent=11 // pred_region
          %s191 = ssub.s32 64, 64
          %192 = vsyncadd [#allocation6], %s191
          %s193 = smul.addr %s25, 64
          %s194 = scalar_lea.hbm %s1, %s193
          %s196 = sshll.u32 [#allocation5], 4
          %s197 = int_to_ptr.vmem [resolvable:$true] %s196
          %199 = dma.hbm_to_vmem [thread:$0]  %s194, 64, %s197, [#allocation6]
        $region20: #{tpu_custom_call.1} parent=11 // pred_fallthru
          _
      $region12: #{tpu_custom_call.1} parent=5 // pred_fallthru
        _
      %p200 = scmp.lt.s32.totalorder %s15, 2
      // Predicated region
      $region21: #{tpu_custom_call.1} parent=5 // pred_check
        %p201 = pneg %p200
      $region22: #{tpu_custom_call.1} parent=5 // pred_check_branch
        %203 = sbr.rel (%p201) target = $region24
      $region23: #{tpu_custom_call.1} parent=5 // pred_region
        // Predicated region
        $region25: #{tpu_custom_call.1} parent=23 // pred_check
          %p204 = pneg %p99
        $region26: #{tpu_custom_call.1} parent=23 // pred_check_branch
          %206 = sbr.rel (%p204) target = $region28
        $region27: #{tpu_custom_call.1} parent=23 // pred_region
          %s207 = sand.u32 %s15, 1
          %s208 = scalar_lea.sflag [#allocation3], %s207
          %s209 = sand.u32 %s89, 1
          %s210 = smul.addr %s209, 64
          %s211 = scalar_lea.vmem [#allocation7], %s210
          %s212 = smul.u32 4, %s22
          %s214 = ssub.s32 1024, 1024
          %215 = vsyncadd %s208, %s214
          %s216 = smul.addr %s212, 64
          %s217 = scalar_lea.hbm %s2, %s216
          %s218 = sshll.u32 %s211, 4
          %s219 = int_to_ptr.vmem [resolvable:$true] %s218
          %224 = dma.hbm_to_vmem [thread:$0]  %s217, 1024, %s219, %s208, 512, 256, 16
        $region28: #{tpu_custom_call.1} parent=23 // pred_fallthru
          _
        // Predicated region
        $region29: #{tpu_custom_call.1} parent=23 // pred_check
          %p225 = pneg %p125
        $region30: #{tpu_custom_call.1} parent=23 // pred_check_branch
          %227 = sbr.rel (%p225) target = $region32
        $region31: #{tpu_custom_call.1} parent=23 // pred_region
          %s228 = sand.u32 %s15, 1
          %s229 = scalar_lea.sflag [#allocation3], %s228
          %s230 = sand.u32 %s115, 1
          %s231 = smul.addr %s230, 16
          %s232 = scalar_lea.vmem [#allocation8], %s231
          %s233 = smul.u32 4, %s22
          %s235 = ssub.s32 256, 256
          %236 = vsyncadd %s229, %s235
          %s237 = smul.addr %s233, 64
          %s238 = scalar_lea.hbm %s3, %s237
          %s240 = sshll.u32 %s232, 4
          %s241 = int_to_ptr.vmem [resolvable:$true] %s240
          %243 = dma.hbm_to_vmem [thread:$0]  %s238, 256, %s241, %s229
        $region32: #{tpu_custom_call.1} parent=23 // pred_fallthru
          _
      $region24: #{tpu_custom_call.1} parent=5 // pred_fallthru
        _
      %p244 = scmp.le.s32.totalorder 1, %s15
      %p245 = scmp.lt.s32.totalorder %s15, 3
      %p246 = pnand %p244, %p245
      %p247 = pneg %p246
      // Predicated region
      $region33: #{tpu_custom_call.1} parent=5 // pred_check
        _
      $region34: #{tpu_custom_call.1} parent=5 // pred_check_branch
        %249 = sbr.rel (%p246) target = $region36
      $region35: #{tpu_custom_call.1} parent=5 // pred_region
        %s250 = ssub.s32 %s15, 1
        // Predicated region
        $region37: #{tpu_custom_call.1} parent=35 // pred_check
          %p251 = pneg %p53
        $region38: #{tpu_custom_call.1} parent=35 // pred_check_branch
          %253 = sbr.rel (%p251) target = $region40
        $region39: #{tpu_custom_call.1} parent=35 // pred_region
          %254 = dma.done [#allocation3], 64
        $region40: #{tpu_custom_call.1} parent=35 // pred_fallthru
          _
        // Predicated region
        $region41: #{tpu_custom_call.1} parent=35 // pred_check
          %p255 = pneg %p79
        $region42: #{tpu_custom_call.1} parent=35 // pred_check_branch
          %257 = sbr.rel (%p255) target = $region44
        $region43: #{tpu_custom_call.1} parent=35 // pred_region
          %258 = dma.done [#allocation6], 64
        $region44: #{tpu_custom_call.1} parent=35 // pred_fallthru
          _
        %s259 = sand.u32 %s20, 1
        %s260 = scalar_lea.sflag [#allocation3], %s259
        %s261 = sand.u32 %s92, 1
        %s262 = smul.addr %s261, 64
        %s263 = scalar_lea.vmem [#allocation7], %s262
        // Predicated region
        $region45: #{tpu_custom_call.1} parent=35 // pred_check
          %p264 = pneg %p105
        $region46: #{tpu_custom_call.1} parent=35 // pred_check_branch
          %266 = sbr.rel (%p264) target = $region48
        $region47: #{tpu_custom_call.1} parent=35 // pred_region
          %267 = dma.done %s260, 1024
        $region48: #{tpu_custom_call.1} parent=35 // pred_fallthru
          _
        %s268 = sand.u32 %s20, 1
        %s269 = scalar_lea.sflag [#allocation3], %s268
        %s270 = sand.u32 %s118, 1
        %s271 = smul.addr %s270, 16
        %s272 = scalar_lea.vmem [#allocation8], %s271
        // Predicated region
        $region49: #{tpu_custom_call.1} parent=35 // pred_check
          %p273 = pneg %p131
        $region50: #{tpu_custom_call.1} parent=35 // pred_check_branch
          %275 = sbr.rel (%p273) target = $region52
        $region51: #{tpu_custom_call.1} parent=35 // pred_region
          %276 = dma.done %s269, 256
        $region52: #{tpu_custom_call.1} parent=35 // pred_fallthru
          _
        %p277 = pneg %p53
        %p278 = pneg %p50
        %p279 = pneg %p79
        %p280 = pneg %p76
        %s281 = sand.u32 %s20, 1
        %s282 = scalar_lea.sflag [#allocation3], %s281
        %s283 = sand.u32 %s92, 1
        %s284 = smul.addr %s283, 64
        %s285 = scalar_lea.vmem [#allocation7], %s284
        %p286 = pneg %p105
        %p287 = pneg %p102
        %s288 = sand.u32 %s20, 1
        %s289 = scalar_lea.sflag [#allocation3], %s288
        %s290 = sand.u32 %s118, 1
        %s291 = smul.addr %s290, 16
        %s292 = scalar_lea.vmem [#allocation8], %s291
        %p293 = pneg %p131
        %p294 = pneg %p128
        %p295 = pneg %p159
        %p296 = pneg %p156
        %s297 = sand.u32 %s146, 1
        %s298 = scalar_lea.sflag [#allocation4], %s297
        %s299 = sand.u32 %s146, 1
        %s300 = smul.addr %s299, 32
        %s301 = scalar_lea.vmem [#allocation9], %s300
        %s302 = smul.u32 4, %s24
        %s303 = smul.u32 4, %s24
        %s304 = smul.u32 4, %s24
        %v306 = vld [vmem:[#allocation2] sm:$0xf]
        %v307 = vld [vmem:[%s263] sm:$0xff]
        %v308 = vld [vmem:[%s263 + $0x8] sm:$0xff]
        %v309 = vld [vmem:[%s263 + $0x10] sm:$0xff]
        %v310 = vld [vmem:[%s263 + $0x18] sm:$0xff]
        %v311 = vld [vmem:[%s263 + $0x20] sm:$0xff]
        %v312 = vld [vmem:[%s263 + $0x28] sm:$0xff]
        %v313 = vld [vmem:[%s263 + $0x30] sm:$0xff]
        %v314 = vld [vmem:[%s263 + $0x38] sm:$0xff]
        %v323 = vunpack.c.l.b16 %v307
        %v324 = vunpack.c.h.b16 %v307
        %v325 = vunpack.c.l.b16 %v308
        %v326 = vunpack.c.h.b16 %v308
        %v327 = vunpack.c.l.b16 %v309
        %v328 = vunpack.c.h.b16 %v309
        %v329 = vunpack.c.l.b16 %v310
        %v330 = vunpack.c.h.b16 %v310
        %v331 = vunpack.c.l.b16 %v311
        %v332 = vunpack.c.h.b16 %v311
        %v333 = vunpack.c.l.b16 %v312
        %v334 = vunpack.c.h.b16 %v312
        %v335 = vunpack.c.l.b16 %v313
        %v336 = vunpack.c.h.b16 %v313
        %v337 = vunpack.c.l.b16 %v314
        %v338 = vunpack.c.h.b16 %v314
        %v339 = vpack.c.b16 %v327, %v323
        %v340 = vpack.c.b16 %v328, %v324
        %v341 = vpack.c.b16 %v329, %v325
        %v342 = vpack.c.b16 %v330, %v326
        %v343 = vpack.c.b16 %v335, %v331
        %v344 = vpack.c.b16 %v336, %v332
        %v345 = vpack.c.b16 %v337, %v333
        %v346 = vpack.c.b16 %v338, %v334
        %vm355 = vcmask 261120
        %v357 = vsel %vm355, %v306, 0
        %359 = vmatprep.subr.bf16.mxu0 %v340
        %360 = vmatpush1.bf16.msra.mxu0 %v339
        %361 = vmatprep.subr.bf16.mxu0 %v344
        %362 = vmatpush1.bf16.msra.mxu0 %v343
        %363 = vmatprep.subr.bf16.mxu0 0
        %364 = vmatpush1.bf16.msra.mxu0 0
        %365 = vmatprep.subr.bf16.mxu0 0
        %366 = vmatpush1.bf16.msra.mxu0 0
        %367 = vmatprep.subr.bf16.mxu0 0
        %368 = vmatpush1.bf16.msra.mxu0 0
        %369 = vmatprep.subr.bf16.mxu0 0
        %370 = vmatpush1.bf16.msra.mxu0 0
        %371 = vmatprep.subr.bf16.mxu0 0
        %372 = vmatpush1.bf16.msra.mxu0 0
        %373 = vmatprep.subr.bf16.mxu0 0
        %374 = vmatpush1.bf16.msra.mxu0 0
        %375 = vmatprep.subr.bf16.mxu0 0
        %376 = vmatpush1.bf16.msra.mxu0 0
        %377 = vmatprep.subr.bf16.mxu0 0
        %378 = vmatpush1.bf16.msra.mxu0 0
        %379 = vmatprep.subr.bf16.mxu0 0
        %380 = vmatpush1.bf16.msra.mxu0 0
        %381 = vmatprep.subr.bf16.mxu0 0
        %382 = vmatpush1.bf16.msra.mxu0 0
        %383 = vmatprep.subr.bf16.mxu0 0
        %384 = vmatpush1.bf16.msra.mxu0 0
        %385 = vmatprep.subr.bf16.mxu0 0
        %386 = vmatpush1.bf16.msra.mxu0 0
        %387 = vmatprep.subr.bf16.mxu0 0
        %388 = vmatpush1.bf16.msra.mxu0 0
        %389 = vmatprep.subr.bf16.mxu0 0
        %390 = vmatpush1.bf16.msra.mxu0 0
        %391 = vmatprep.mubr.bf16.mxu0 0
        %392 = vmatmul.mubr.bf16.gmra.mrb[0].mxu0 %v357
        %v393 = vpop.f32.mrb[0].mxu0
        %v394 = vadd.f32 0.0, %v393
        %v395 = vpop.f32.mrb[0].mxu0
        %v396 = vadd.f32 0.0, %v395
        %v397 = vpop.f32.mrb[0].mxu0
        %v398 = vpop.f32.mrb[0].mxu0
        %399 = vdwg.mxu0
        %400 = vmatprep.subr.bf16.mxu0 %v342
        %401 = vmatpush1.bf16.msra.mxu0 %v341
        %402 = vmatprep.subr.bf16.mxu0 %v346
        %403 = vmatpush1.bf16.msra.mxu0 %v345
        %404 = vmatprep.subr.bf16.mxu0 0
        %405 = vmatpush1.bf16.msra.mxu0 0
        %406 = vmatprep.subr.bf16.mxu0 0
        %407 = vmatpush1.bf16.msra.mxu0 0
        %408 = vmatprep.subr.bf16.mxu0 0
        %409 = vmatpush1.bf16.msra.mxu0 0
        %410 = vmatprep.subr.bf16.mxu0 0
        %411 = vmatpush1.bf16.msra.mxu0 0
        %412 = vmatprep.subr.bf16.mxu0 0
        %413 = vmatpush1.bf16.msra.mxu0 0
        %414 = vmatprep.subr.bf16.mxu0 0
        %415 = vmatpush1.bf16.msra.mxu0 0
        %416 = vmatprep.subr.bf16.mxu0 0
        %417 = vmatpush1.bf16.msra.mxu0 0
        %418 = vmatprep.subr.bf16.mxu0 0
        %419 = vmatpush1.bf16.msra.mxu0 0
        %420 = vmatprep.subr.bf16.mxu0 0
        %421 = vmatpush1.bf16.msra.mxu0 0
        %422 = vmatprep.subr.bf16.mxu0 0
        %423 = vmatpush1.bf16.msra.mxu0 0
        %424 = vmatprep.subr.bf16.mxu0 0
        %425 = vmatpush1.bf16.msra.mxu0 0
        %426 = vmatprep.subr.bf16.mxu0 0
        %427 = vmatpush1.bf16.msra.mxu0 0
        %428 = vmatprep.subr.bf16.mxu0 0
        %429 = vmatpush1.bf16.msra.mxu0 0
        %430 = vmatprep.subr.bf16.mxu0 0
        %431 = vmatpush1.bf16.msra.mxu0 0
        %432 = vmatprep.mubr.bf16.mxu0 0
        %433 = vmatmul.mubr.bf16.gmra.mrb[0].mxu0 %v357
        %v434 = vpop.f32.mrb[0].mxu0
        %v435 = vadd.f32 0.0, %v434
        %v436 = vpop.f32.mrb[0].mxu0
        %v437 = vadd.f32 0.0, %v436
        %v438 = vpop.f32.mrb[0].mxu0
        %v439 = vpop.f32.mrb[0].mxu0
        %440 = vdwg.mxu0
        %v441 = vld [vmem:[#allocation5] sm:$0xf]
        %v442 = vld [vmem:[%s272] sm:$0xff]
        %v443 = vld [vmem:[%s272 + $0x8] sm:$0xff]
        %v446 = vunpack.c.l.b16 %v442
        %v447 = vunpack.c.h.b16 %v442
        %v448 = vunpack.c.l.b16 %v443
        %v449 = vunpack.c.h.b16 %v443
        %v450 = vpack.c.b16 %v446, %v446
        %v451 = vpack.c.b16 %v447, %v447
        %v452 = vpack.c.b16 %v448, %v448
        %v453 = vpack.c.b16 %v449, %v449
        %vm454 = vcmask 64512
        %v456 = vsel %vm454, %v441, 0
        %vm458 = vcmask 1043456
        %v460 = vsel %vm458, %v450, 0
        %v463 = vsel %vm458, %v451, 0
        %v466 = vsel %vm458, %v452, 0
        %v469 = vsel %vm458, %v453, 0
        %471 = vmatprep.subr.bf16.mxu0 %v463
        %472 = vmatpush1.bf16.msra.mxu0 %v460
        %473 = vmatprep.subr.bf16.mxu0 0
        %474 = vmatpush1.bf16.msra.mxu0 0
        %475 = vmatprep.subr.bf16.mxu0 0
        %476 = vmatpush1.bf16.msra.mxu0 0
        %477 = vmatprep.subr.bf16.mxu0 0
        %478 = vmatpush1.bf16.msra.mxu0 0
        %479 = vmatprep.subr.bf16.mxu0 0
        %480 = vmatpush1.bf16.msra.mxu0 0
        %481 = vmatprep.subr.bf16.mxu0 0
        %482 = vmatpush1.bf16.msra.mxu0 0
        %483 = vmatprep.subr.bf16.mxu0 0
        %484 = vmatpush1.bf16.msra.mxu0 0
        %485 = vmatprep.subr.bf16.mxu0 0
        %486 = vmatpush1.bf16.msra.mxu0 0
        %487 = vmatprep.subr.bf16.mxu0 0
        %488 = vmatpush1.bf16.msra.mxu0 0
        %489 = vmatprep.subr.bf16.mxu0 0
        %490 = vmatpush1.bf16.msra.mxu0 0
        %491 = vmatprep.subr.bf16.mxu0 0
        %492 = vmatpush1.bf16.msra.mxu0 0
        %493 = vmatprep.subr.bf16.mxu0 0
        %494 = vmatpush1.bf16.msra.mxu0 0
        %495 = vmatprep.subr.bf16.mxu0 0
        %496 = vmatpush1.bf16.msra.mxu0 0
        %497 = vmatprep.subr.bf16.mxu0 0
        %498 = vmatpush1.bf16.msra.mxu0 0
        %499 = vmatprep.subr.bf16.mxu0 0
        %500 = vmatpush1.bf16.msra.mxu0 0
        %501 = vmatprep.subr.bf16.mxu0 0
        %502 = vmatpush1.bf16.msra.mxu0 0
        %503 = vmatprep.mubr.bf16.mxu0 0
        %504 = vmatmul.mubr.bf16.gmra.mrb[0].mxu0 %v456
        %v505 = vpop.f32.mrb[0].mxu0
        %v506 = vadd.f32 0.0, %v505
        %v507 = vpop.f32.mrb[0].mxu0
        %v508 = vadd.f32 0.0, %v507
        %v509 = vpop.f32.mrb[0].mxu0
        %v510 = vpop.f32.mrb[0].mxu0
        %511 = vdwg.mxu0
        %512 = vmatprep.subr.bf16.mxu0 %v469
        %513 = vmatpush1.bf16.msra.mxu0 %v466
        %514 = vmatprep.subr.bf16.mxu0 0
        %515 = vmatpush1.bf16.msra.mxu0 0
        %516 = vmatprep.subr.bf16.mxu0 0
        %517 = vmatpush1.bf16.msra.mxu0 0
        %518 = vmatprep.subr.bf16.mxu0 0
        %519 = vmatpush1.bf16.msra.mxu0 0
        %520 = vmatprep.subr.bf16.mxu0 0
        %521 = vmatpush1.bf16.msra.mxu0 0
        %522 = vmatprep.subr.bf16.mxu0 0
        %523 = vmatpush1.bf16.msra.mxu0 0
        %524 = vmatprep.subr.bf16.mxu0 0
        %525 = vmatpush1.bf16.msra.mxu0 0
        %526 = vmatprep.subr.bf16.mxu0 0
        %527 = vmatpush1.bf16.msra.mxu0 0
        %528 = vmatprep.subr.bf16.mxu0 0
        %529 = vmatpush1.bf16.msra.mxu0 0
        %530 = vmatprep.subr.bf16.mxu0 0
        %531 = vmatpush1.bf16.msra.mxu0 0
        %532 = vmatprep.subr.bf16.mxu0 0
        %533 = vmatpush1.bf16.msra.mxu0 0
        %534 = vmatprep.subr.bf16.mxu0 0
        %535 = vmatpush1.bf16.msra.mxu0 0
        %536 = vmatprep.subr.bf16.mxu0 0
        %537 = vmatpush1.bf16.msra.mxu0 0
        %538 = vmatprep.subr.bf16.mxu0 0
        %539 = vmatpush1.bf16.msra.mxu0 0
        %540 = vmatprep.subr.bf16.mxu0 0
        %541 = vmatpush1.bf16.msra.mxu0 0
        %542 = vmatprep.subr.bf16.mxu0 0
        %543 = vmatpush1.bf16.msra.mxu0 0
        %544 = vmatprep.mubr.bf16.mxu0 0
        %545 = vmatmul.mubr.bf16.gmra.mrb[0].mxu0 %v456
        %v546 = vpop.f32.mrb[0].mxu0
        %v547 = vadd.f32 0.0, %v546
        %v548 = vpop.f32.mrb[0].mxu0
        %v549 = vadd.f32 0.0, %v548
        %v550 = vpop.f32.mrb[0].mxu0
        %v551 = vpop.f32.mrb[0].mxu0
        %552 = vdwg.mxu0
        %v553 = vmul.f32 %v394, %v506
        %v554 = vmul.f32 %v396, %v508
        %v555 = vmul.f32 %v435, %v547
        %v556 = vmul.f32 %v437, %v549
        %557 = vst [vmem:[%s301] sm:$0xff] %v553
        %558 = vst [vmem:[%s301 + $0x8] sm:$0xff] %v554
        %559 = vst [vmem:[%s301 + $0x10] sm:$0xff] %v555
        %560 = vst [vmem:[%s301 + $0x18] sm:$0xff] %v556
        %s561 = sand.u32 %s146, 1
        %s562 = scalar_lea.sflag [#allocation4], %s561
        %s563 = sand.u32 %s146, 1
        %s564 = smul.addr %s563, 32
        %s565 = scalar_lea.vmem [#allocation9], %s564
        // Predicated region
        $region53: #{tpu_custom_call.1} parent=35 // pred_check
          %p566 = pneg %p156
        $region54: #{tpu_custom_call.1} parent=35 // pred_check_branch
          %568 = sbr.rel (%p566) target = $region56
        $region55: #{tpu_custom_call.1} parent=35 // pred_region
          %s569 = smul.u32 4, %s24
          %s571 = ssub.s32 512, 512
          %572 = vsyncadd %s562, %s571
          %s573 = smul.addr %s25, 8
          %s574 = sadd.s32 %s569, %s573
          %s575 = smul.addr %s574, 128
          %s576 = scalar_lea.hbm %s4, %s575
          %s578 = sshll.u32 %s565, 4
          %s579 = int_to_ptr.vmem [resolvable:$true] %s578
          %581 = dma.vmem_to_hbm [thread:$0]  %s579, 512, %s576, %s562
        $region56: #{tpu_custom_call.1} parent=35 // pred_fallthru
          _
      $region36: #{tpu_custom_call.1} parent=5 // pred_fallthru
        _
      %p582 = scmp.le.s32.totalorder 2, %s15
      // Predicated region
      $region57: #{tpu_custom_call.1} parent=5 // pred_check
        %p583 = pneg %p582
      $region58: #{tpu_custom_call.1} parent=5 // pred_check_branch
        %585 = sbr.rel (%p583) target = $region60
      $region59: #{tpu_custom_call.1} parent=5 // pred_region
        %s586 = ssub.s32 %s15, 2
        // Predicated region
        $region61: #{tpu_custom_call.1} parent=59 // pred_check
          %p587 = pneg %p162
        $region62: #{tpu_custom_call.1} parent=59 // pred_check_branch
          %589 = sbr.rel (%p587) target = $region64
        $region63: #{tpu_custom_call.1} parent=59 // pred_region
          %s590 = sand.u32 %s147, 1
          %s591 = scalar_lea.sflag [#allocation4], %s590
          %s592 = sand.u32 %s147, 1
          %s593 = smul.addr %s592, 32
          %s594 = scalar_lea.vmem [#allocation9], %s593
          %595 = dma.done %s591, 512
        $region64: #{tpu_custom_call.1} parent=59 // pred_fallthru
          _
      $region60: #{tpu_custom_call.1} parent=5 // pred_fallthru
        _
    $region6: #{tpu_custom_call.1} parent=1 // loop_footer
      %s19 = sadd.s32 1, %s15
    $region7: #{tpu_custom_call.1} parent=1 // loop_footer_branch
      %14 = sbr.rel target = $region3
    $region8: #{tpu_custom_call.1} parent=1 // loop_exit
      _
    %596 = vsyncpa [#allocation3], 1
    %s597 = scalar_lea.sflag [#allocation3], 1
    %598 = vsyncpa %s597, 1
    %599 = vsyncpa [#allocation6], 1
    %600 = vsyncpa [#allocation4], 1
    %s601 = scalar_lea.sflag [#allocation4], 1
    %602 = vsyncpa %s601, 1

</llo_original>
